<compile_context>
chip_gen: v5e
topology: v5e:2x2
jax: 0.10.0
libtpu: 0.0.40
codegen_flags: <defaults>
</compile_context>

<pallas_src>
import jax
import jax.numpy as jnp
from jax.experimental import pallas as pl
from jax.experimental.pallas import tpu as pltpu


def _layerscale_kernel(g_ref, x_ref, o_ref):
    # g_ref broadcasts against the x block: (BR, 1) for a batch/channel scale,
    # or (1, BT) for a time-axis scale. Compute in f32, cast once on the way out.
    x = x_ref[...].astype(jnp.float32)
    o_ref[...] = (x * g_ref[...]).astype(o_ref.dtype)


def layer_scale(x: jax.Array, gamma: jax.Array) -> jax.Array:
    """x: (B, C, T); gamma: shape [1, 1, 1] with dims[axis] = dim (any axis)."""
    B, C, T = x.shape
    assert gamma.ndim == 3

    out_dtype = jnp.result_type(x.dtype, gamma.dtype)

    # Flatten (B, C, T) -> (R, T): row-major contiguous, so this is a free
    # bitcast; it decouples the tiling from (possibly tiny) C.
    R = B * C
    x2 = x.reshape(R, T)

    gamma = gamma.astype(jnp.float32)
    time_axis_scale = gamma.shape[2] != 1  # axis == 2 (scale along time/lanes)
    if time_axis_scale:
        g2 = gamma.reshape(1, T)
    else:
        # gamma varies along batch and/or channel -> one scalar per flat row.
        g2 = jnp.broadcast_to(gamma, (B, C, 1)).reshape(R, 1)

    # Multi-MiB lane-dense tiles; <= 4 MiB per block so x + out double buffers
    # (4x block) fit comfortably in 32 MiB scoped VMEM (v7x-safe, v5e with the
    # explicit limit bump below).
    BR = R if R <= 512 else 512        # rows: full extent, or a multiple of 8
    BT = T if T <= 2048 else 2048      # lanes: full extent, or a multiple of 128

    grid = (pl.cdiv(R, BR), pl.cdiv(T, BT))

    if time_axis_scale:
        g_spec = pl.BlockSpec((1, BT), lambda i, j: (0, j))
    else:
        g_spec = pl.BlockSpec((BR, 1), lambda i, j: (i, 0))

    bytes_accessed = (
        R * T * (jnp.dtype(x.dtype).itemsize + jnp.dtype(out_dtype).itemsize)
        + g2.size * 4
    )
    cost = pl.CostEstimate(
        flops=R * T, transcendentals=0, bytes_accessed=bytes_accessed
    )

    out2 = pl.pallas_call(
        _layerscale_kernel,
        out_shape=jax.ShapeDtypeStruct((R, T), out_dtype),
        grid=grid,
        in_specs=[
            g_spec,
            pl.BlockSpec((BR, BT), lambda i, j: (i, j)),
        ],
        out_specs=pl.BlockSpec((BR, BT), lambda i, j: (i, j)),
        compiler_params=pltpu.CompilerParams(
            dimension_semantics=("parallel", "parallel"),
            vmem_limit_bytes=32 * 1024 * 1024,
        ),
        cost_estimate=cost,
    )(g2, x2)

    return out2.reshape(B, C, T)


if __name__ == "__main__":
    # Module config (deterministic, synthetic): dim=C, eps, axis=1.
    B, C, T = 2, 8, 128
    dim, eps, axis = C, 1e-4, 1

    # Parameter init exactly as in __init__: gamma = eps * ones(dims)
    dims = [1, 1, 1]
    dims[axis] = dim
    gamma = eps * jnp.ones(dims, dtype=jnp.float32)

    key = jax.random.PRNGKey(0)
    x = jax.random.normal(key, (B, C, T), dtype=jnp.float32)

    out = layer_scale(x, gamma)
    out = jax.block_until_ready(out)

    # Reference check (plain JAX broadcasting, same semantics as torch).
    ref = gamma * x
    assert out.shape == ref.shape and out.dtype == ref.dtype
    assert jnp.allclose(out, ref, atol=1e-6, rtol=1e-6)

    print("KERNEL_OK")
</pallas_src>

<mosaic_0001>
module attributes {stable_mosaic.version = 11 : i64} {
  func.func @_layerscale_kernel(%arg0: i32, %arg1: i32, %arg2: memref<16x1xf32, #tpu.memory_space<vmem>>, %arg3: memref<16x128xf32, #tpu.memory_space<vmem>>, %arg4: memref<16x128xf32, #tpu.memory_space<vmem>>) attributes {dimension_semantics = [#tpu.dimension_semantics<parallel>, #tpu.dimension_semantics<parallel>], iteration_bounds = array<i64: 1, 1>, scalar_prefetch = 0 : i64, scratch_operands = 0 : i64, tpu.core_type = #tpu.core_type<tc>, window_params = [{transform_indices = @transform_0, window_bounds = array<i64: 16, 1>}, {transform_indices = @transform_1, window_bounds = array<i64: 16, 128>}, {transform_indices = @transform_2, window_bounds = array<i64: 16, 128>}]} {
    %c0 = arith.constant 0 : index
    %c0_0 = arith.constant 0 : index
    %0 = vector.load %arg3[%c0, %c0_0] : memref<16x128xf32, #tpu.memory_space<vmem>>, vector<16x128xf32>
    %c0_1 = arith.constant 0 : index
    %c0_2 = arith.constant 0 : index
    %1 = vector.load %arg2[%c0_1, %c0_2] : memref<16x1xf32, #tpu.memory_space<vmem>>, vector<16x1xf32>
    %2 = vector.broadcast %1 : vector<16x1xf32> to vector<16x128xf32>
    %3 = arith.mulf %0, %2 : vector<16x128xf32>
    %c0_3 = arith.constant 0 : index
    %c0_4 = arith.constant 0 : index
    %4 = vector.load %arg4[%c0_3, %c0_4] : memref<16x128xf32, #tpu.memory_space<vmem>>, vector<16x128xf32>
    tpu.vector_store %arg4[%c0_3, %c0_4], %3 {strides = array<i32>} : memref<16x128xf32, #tpu.memory_space<vmem>>, vector<16x128xf32>,
    return
  }
  func.func @transform_0(%arg0: i32, %arg1: i32) -> (i32, i32) {
    %c0_i32 = arith.constant 0 : i32
    %c0_i32_0 = arith.constant 0 : i32
    return %arg0, %c0_i32 : i32, i32
  }
  func.func @transform_1(%arg0: i32, %arg1: i32) -> (i32, i32) {
    %c0_i32 = arith.constant 0 : i32
    return %arg0, %arg1 : i32, i32
  }
  func.func @transform_2(%arg0: i32, %arg1: i32) -> (i32, i32) {
    %c0_i32 = arith.constant 0 : i32
    return %arg0, %arg1 : i32, i32
  }
}

</mosaic_0001>

<llo_original>
// kernel: tpu_custom_call.1
$region0: #{tpu_custom_call.1}
  #allocation0 [shape = 'u32[]', space=smem, size = 0x4, offset = 0x4, fixed_abs, tag = 'smem constant byte address 0x4 - core index']
  #allocation1 [shape = 'u32[72,128]{1,0:T(1,128)}', space=vmem, size = 0x9000, scoped, tag = 'internal scratch']
  %s0 = inlined_call_operand.vmem [shape: f32[16,1], index: 0, kind: input, shape index: {}]
  %s1 = inlined_call_operand.vmem [shape: f32[16,128], index: 1, kind: input, shape index: {}]
  %s2 = inlined_call_operand.hbm [shape: f32[16,128], index: 2, kind: output, shape index: {}]
  %s3 = sld [smem:[#allocation0]]
  $region18: #{tpu_custom_call.1} parent=0
    _
  %s5 = ssub.s32 1, %s3
  %s6 = scalar_select 0, %s5, %s3
  $region1: #{tpu_custom_call.1} parent=0
    #allocation2 [shape = 'u8[8192]{0}', space=vmem, size = 0x2000, scoped, tag = 'output window, operand 0, single buffered']
    #allocation3 [shape = 's32[1]{0}', space=sflag, size = 0x4, scoped, tag = 'scoped memory for tpu_custom_call.1']
    %7 = vsyncpa [#allocation3], 0
    // Predicated region
    $region2: #{tpu_custom_call.1} parent=1 // pred_check
      _
    $region3: #{tpu_custom_call.1} parent=1 // pred_check_branch
      %9 = sbr.rel (0) target = $region5
    $region4: #{tpu_custom_call.1} parent=1 // pred_region
      _
    $region5: #{tpu_custom_call.1} parent=1 // pred_fallthru
      _
    // Predicated region
    $region6: #{tpu_custom_call.1} parent=1 // pred_check
      _
    $region7: #{tpu_custom_call.1} parent=1 // pred_check_branch
      %11 = sbr.rel (0) target = $region9
    $region8: #{tpu_custom_call.1} parent=1 // pred_region
      _
    $region9: #{tpu_custom_call.1} parent=1 // pred_fallthru
      _
    %v12 = vld [vmem:[%s1] sm:$0xff]
    %v13 = vld [vmem:[%s1 + $0x8] sm:$0xff]
    %v14 = vld [vmem:[%s0] sm:$0xff]
    %v15 = vld [vmem:[%s0 + $0x8] sm:$0xff]
    %17 = vset.pattern.permute.xlu0 0
    %18 = vperm.xlu0 %17, %v14
    %v19 = vpop.permute.xlu0 %18
    %22 = vset.pattern.permute.xlu0 0
    %23 = vperm.xlu0 %22, %v15
    %v24 = vpop.permute.xlu0 %23
    %v26 = vmul.f32 %v12, %v19
    %v27 = vmul.f32 %v13, %v24
    %28 = vst [vmem:[#allocation2] sm:$0xff] %v26
    %29 = vst [vmem:[#allocation2 + $0x8] sm:$0xff] %v27
    // Predicated region
    $region10: #{tpu_custom_call.1} parent=1 // pred_check
      _
    $region11: #{tpu_custom_call.1} parent=1 // pred_check_branch
      %31 = sbr.rel (0) target = $region13
    $region12: #{tpu_custom_call.1} parent=1 // pred_region
      %33 = vsyncadd [#allocation3], 0
      %s34 = sshll.u32 [#allocation2], 4
      %s35 = int_to_ptr.vmem [resolvable:$true] %s34
      %s36 = sshll.u32 %s2, 4
      %s37 = int_to_ptr.hbm [resolvable:$true] %s36
      %42 = dma.vmem_to_hbm [thread:$0]  %s35, 256, %s37, [#allocation3], 128, 128, 8
    $region13: #{tpu_custom_call.1} parent=1 // pred_fallthru
      _
    // Predicated region
    $region14: #{tpu_custom_call.1} parent=1 // pred_check
      _
    $region15: #{tpu_custom_call.1} parent=1 // pred_check_branch
      %44 = sbr.rel (0) target = $region17
    $region16: #{tpu_custom_call.1} parent=1 // pred_region
      %46 = dma.done [#allocation3], 256
    $region17: #{tpu_custom_call.1} parent=1 // pred_fallthru
      _
    %47 = vsyncpa [#allocation3], 1

</llo_original>
